<compile_context>
chip_gen: v7x
topology: tpu7x:2x2x1
jax: 0.10.0
libtpu: 0.0.40
codegen_flags: <defaults>
</compile_context>

<pallas_src>
import math

import jax
import jax.numpy as jnp
from jax.experimental import pallas as pl
from jax.experimental.pallas import tpu as pltpu


def _round_up(x, m):
    return (x + m - 1) // m * m


# ---------------------------------------------------------------------------
# Kernel
# ---------------------------------------------------------------------------
def _disc_kernel(x_ref, s_ref, w_ref, o_ref, acc_ref):
    """grid = (N_tiles, K_tiles); K (contraction) is the last, 'arbitrary' axis.

    x_ref   : (tn, h_pad)   resident across K
    s_ref   : (tn, tk)
    w_ref   : (tk, h_pad)
    o_ref   : (tn, 1)       resident across K, written at the last K step
    acc_ref : (tn, h_pad)   f32 scratch accumulating h = summary @ weight
    """
    k = pl.program_id(1)

    @pl.when(k == 0)
    def _init():
        acc_ref[...] = jnp.zeros_like(acc_ref)

    # Partial h on the MXU, f32 accumulation in VMEM scratch.
    acc_ref[...] += jnp.dot(s_ref[...], w_ref[...],
                            preferred_element_type=jnp.float32)

    @pl.when(k == pl.num_programs(1) - 1)
    def _finalize():
        # Epilogue only once per N tile: x * h on the VPU (f32), then a
        # per-row (lane) reduction on the XLU.
        prod = x_ref[...].astype(jnp.float32) * acc_ref[...]
        o_ref[...] = jnp.sum(prod, axis=1, keepdims=True).astype(o_ref.dtype)


# ---------------------------------------------------------------------------
# VMEM budgeting / tile selection
# ---------------------------------------------------------------------------
_MOSAIC_HEADROOM = 2 * 1024 * 1024
_TN_CANDIDATES = (1024, 512, 256, 128, 64, 32, 16, 8)


def _vmem_capacity_bytes():
    cap = 64 * 1024 * 1024  # conservative default = v7x per-TC VMEM
    try:
        info = pltpu.get_tpu_info()
        c = getattr(info, "vmem_capacity_bytes", None)
        if c:
            cap = int(c)
    except Exception:
        pass
    return cap


def _vmem_budget_bytes():
    # ~48 MiB on v7x (64 MiB/TC), ~96 MiB on v5e/v6e (128 MiB/TC).
    return (_vmem_capacity_bytes() * 3) // 4


def _vmem_estimate(tn, tk, h_pad, in_itemsize):
    dbl_inputs = 2 * (tn * h_pad + tn * tk + tk * h_pad) * in_itemsize
    acc = tn * h_pad * 4            # f32 accumulator scratch (single buffer)
    outb = 2 * tn * 128 * 4         # (tn, 1) output blocks lane-pad to (tn, 128)
    return dbl_inputs + acc + outb + _MOSAIC_HEADROOM


def _pick_tiles(N, h_pad, itemsize, budget, tile_n, tile_k):
    n_cap = _round_up(N, 8)
    if tile_n is not None:
        tn_cands = [min(_round_up(int(tile_n), 8), n_cap)]
    else:
        tn_cands = []
        for c in _TN_CANDIDATES:
            c = min(c, n_cap)
            if c not in tn_cands:
                tn_cands.append(c)

    tk_all = sorted({c for c in (h_pad, 2048, 1024, 512, 256, 128)
                     if c <= h_pad and h_pad % c == 0}, reverse=True)
    if tile_k is not None and h_pad % int(tile_k) == 0:
        tk_cands = [int(tile_k)]
    else:
        tk_cands = tk_all

    # Prefer growing tn over tk: tn divides how many times the HxH weight is
    # re-streamed from HBM; tk only changes the number of K steps.
    for tn in tn_cands:
        for tk in tk_cands:
            if _vmem_estimate(tn, tk, h_pad, itemsize) <= budget:
                return tn, tk
    # TODO(synk): for very large H (where even the minimal tiles overflow the
    # budget) add a third grid axis tiling weight's output-column dimension so
    # the resident (tn, h_pad) x tile / accumulator stay bounded.
    return tn_cands[-1], tk_cands[-1]


# ---------------------------------------------------------------------------
# Wrapper
# ---------------------------------------------------------------------------
def discriminator_forward(x, summary, weight, *, tile_n=None, tile_k=None,
                          use_bf16=False, interpret=False):
    """Pallas equivalent of Discriminator.forward.

    x:       (N, H)
    summary: (N, H)
    weight:  (H, H)
    returns: (N,)  (computed in f32, cast back to x.dtype)
    """
    N, H = x.shape
    assert summary.shape == (N, H)
    assert weight.shape == (H, H)

    out_dtype = x.dtype
    compute_dtype = jnp.bfloat16 if use_bf16 else x.dtype
    itemsize = jnp.dtype(compute_dtype).itemsize

    h_pad = _round_up(H, 128)
    budget = _vmem_budget_bytes()
    tn, tk = _pick_tiles(N, h_pad, itemsize, budget, tile_n, tile_k)

    # Megacore: make sure the "parallel" N axis has >= 2 blocks on v7x
    # (harmless on v5e/v6e); only when the caller did not fix tile_n.
    if tile_n is None and pl.cdiv(N, tn) == 1 and N >= 16:
        tn = max(8, _round_up(pl.cdiv(N, 2), 8))

    grid_n = pl.cdiv(N, tn)
    grid_k = h_pad // tk
    grid = (grid_n, grid_k)

    # Only the contraction / column dim needs zero padding for correctness
    # (zero weight rows/cols kill contributions from the padded columns).
    # The row (N) axis relies on Pallas partial-block masking -> no big copies.
    x_p, s_p, w_p = x, summary, weight
    if h_pad != H:
        x_p = jnp.pad(x, ((0, 0), (0, h_pad - H)))
        s_p = jnp.pad(summary, ((0, 0), (0, h_pad - H)))
        w_p = jnp.pad(weight, ((0, h_pad - H), (0, h_pad - H)))
    if x_p.dtype != compute_dtype:
        x_p = x_p.astype(compute_dtype)
        s_p = s_p.astype(compute_dtype)
        w_p = w_p.astype(compute_dtype)

    cost = pl.CostEstimate(
        flops=int(2 * N * h_pad * h_pad + 2 * N * h_pad),
        transcendentals=0,
        # weight panel is re-streamed from HBM once per N tile.
        bytes_accessed=int((x_p.size + s_p.size + grid_n * w_p.size) * itemsize
                           + N * 4),
    )

    vmem_limit = int(min(max(_vmem_estimate(tn, tk, h_pad, itemsize),
                             16 * 1024 * 1024),
                         budget))

    out = pl.pallas_call(
        _disc_kernel,
        out_shape=jax.ShapeDtypeStruct((N, 1), jnp.float32),
        grid_spec=pltpu.PrefetchScalarGridSpec(
            num_scalar_prefetch=0,
            grid=grid,
            in_specs=[
                pl.BlockSpec((tn, h_pad), lambda i, k: (i, 0)),   # x (resident over k)
                pl.BlockSpec((tn, tk),    lambda i, k: (i, k)),   # summary
                pl.BlockSpec((tk, h_pad), lambda i, k: (k, 0)),   # weight
            ],
            out_specs=pl.BlockSpec((tn, 1), lambda i, k: (i, 0)),
            scratch_shapes=[pltpu.VMEM((tn, h_pad), jnp.float32)],
        ),
        compiler_params=pltpu.CompilerParams(
            dimension_semantics=("parallel", "arbitrary"),
            vmem_limit_bytes=vmem_limit,
        ),
        cost_estimate=cost,
        interpret=interpret,
    )(x_p, s_p, w_p)

    return out[:, 0].astype(out_dtype)


def init_discriminator_weight(key, hidden_dim, dtype=jnp.float32):
    """Mirrors PyG's `uniform(size, weight)`: U(-1/sqrt(size), 1/sqrt(size))."""
    bound = 1.0 / math.sqrt(hidden_dim)
    return jax.random.uniform(
        key, (hidden_dim, hidden_dim), dtype=dtype, minval=-bound, maxval=bound
    )


# ---------------------------------------------------------------------------
# Demo / self-check
# ---------------------------------------------------------------------------
if __name__ == "__main__":
    key = jax.random.PRNGKey(0)

    def _ref(x, s, w):
        h = jnp.dot(s, w, precision=jax.lax.Precision.HIGHEST)
        return jnp.sum(x * h, axis=1)

    # Case 1: tiny, unaligned H (exercises the column-padding path), grid (1, 1).
    N1, H1 = 8, 32
    k_w, k_x, k_s, key = jax.random.split(key, 4)
    w1 = init_discriminator_weight(k_w, H1)
    x1 = jax.random.normal(k_x, (N1, H1), dtype=jnp.float32)
    s1 = jax.random.normal(k_s, (N1, H1), dtype=jnp.float32)
    out1 = jax.block_until_ready(discriminator_forward(x1, s1, w1))
    ref1 = _ref(x1, s1, w1)
    assert out1.shape == (N1,)
    assert jnp.allclose(out1, ref1, atol=2e-3, rtol=2e-3), \
        float(jnp.max(jnp.abs(out1 - ref1)))

    # Case 2: N tiling + K accumulation + megacore axis, grid (3, 2).
    N2, H2 = 384, 256
    k_w, k_x, k_s, key = jax.random.split(key, 4)
    w2 = init_discriminator_weight(k_w, H2)
    x2 = jax.random.normal(k_x, (N2, H2), dtype=jnp.float32)
    s2 = jax.random.normal(k_s, (N2, H2), dtype=jnp.float32)
    out2 = jax.block_until_ready(
        discriminator_forward(x2, s2, w2, tile_n=128, tile_k=128))
    ref2 = _ref(x2, s2, w2)
    assert out2.shape == (N2,)
    assert jnp.allclose(out2, ref2, atol=2e-3, rtol=2e-3), \
        float(jnp.max(jnp.abs(out2 - ref2)))

    # Case 3: N not a multiple of the tile -> partial last row block
    # (no N padding, masked partial write), H already 128-aligned (no copies).
    N3, H3 = 100, 128
    k_w, k_x, k_s, key = jax.random.split(key, 4)
    w3 = init_discriminator_weight(k_w, H3)
    x3 = jax.random.normal(k_x, (N3, H3), dtype=jnp.float32)
    s3 = jax.random.normal(k_s, (N3, H3), dtype=jnp.float32)
    out3 = jax.block_until_ready(
        discriminator_forward(x3, s3, w3, tile_n=64))
    ref3 = _ref(x3, s3, w3)
    assert out3.shape == (N3,)
    assert jnp.allclose(out3, ref3, atol=2e-3, rtol=2e-3), \
        float(jnp.max(jnp.abs(out3 - ref3)))

    # Case 4: optional bf16 fast path (f32 accumulation / epilogue).
    out4 = jax.block_until_ready(
        discriminator_forward(x2, s2, w2, use_bf16=True))
    x2b = x2.astype(jnp.bfloat16)
    s2b = s2.astype(jnp.bfloat16)
    w2b = w2.astype(jnp.bfloat16)
    ref4 = jnp.sum(
        x2b.astype(jnp.float32)
        * jnp.dot(s2b, w2b, preferred_element_type=jnp.float32), axis=1)
    assert out4.shape == (N2,)
    assert jnp.allclose(out4, ref4, atol=5e-2, rtol=5e-2), \
        float(jnp.max(jnp.abs(out4 - ref4)))

    print("KERNEL_OK")
</pallas_src>

<mosaic_0001>
module attributes {stable_mosaic.version = 11 : i64} {
  func.func @_disc_kernel(%arg0: i32, %arg1: i32, %arg2: memref<8x128xf32, #tpu.memory_space<vmem>>, %arg3: memref<8x128xf32, #tpu.memory_space<vmem>>, %arg4: memref<128x128xf32, #tpu.memory_space<vmem>>, %arg5: memref<8x1xf32, #tpu.memory_space<vmem>>, %arg6: memref<8x128xf32, #tpu.memory_space<vmem>>) attributes {dimension_semantics = [#tpu.dimension_semantics<parallel>, #tpu.dimension_semantics<arbitrary>], iteration_bounds = array<i64: 1, 1>, scalar_prefetch = 0 : i64, scratch_operands = 1 : i64, tpu.core_type = #tpu.core_type<tc>, window_params = [{transform_indices = @transform_0, window_bounds = array<i64: 8, 128>}, {transform_indices = @transform_1, window_bounds = array<i64: 8, 128>}, {transform_indices = @transform_2, window_bounds = array<i64: 128, 128>}, {transform_indices = @transform_3, window_bounds = array<i64: 8, 1>}]} {
    %c0_i32 = arith.constant 0 : i32
    %0 = arith.cmpi eq, %arg1, %c0_i32 : i32
    %1 = arith.extui %0 : i1 to i32
    %c0_i32_0 = arith.constant 0 : i32
    %2 = arith.cmpi ne, %1, %c0_i32_0 : i32
    scf.if %2 {
      %cst_10 = arith.constant 0.000000e+00 : f32
      %12 = vector.broadcast %cst_10 : f32 to vector<8x128xf32>
      %c0_11 = arith.constant 0 : index
      %c0_12 = arith.constant 0 : index
      %13 = vector.load %arg6[%c0_11, %c0_12] : memref<8x128xf32, #tpu.memory_space<vmem>>, vector<8x128xf32>
      tpu.vector_store %arg6[%c0_11, %c0_12], %12 {strides = array<i32>} : memref<8x128xf32, #tpu.memory_space<vmem>>, vector<8x128xf32>,
    } else {
    }
    %c0 = arith.constant 0 : index
    %c0_1 = arith.constant 0 : index
    %3 = vector.load %arg6[%c0, %c0_1] : memref<8x128xf32, #tpu.memory_space<vmem>>, vector<8x128xf32>
    %c0_2 = arith.constant 0 : index
    %c0_3 = arith.constant 0 : index
    %4 = vector.load %arg3[%c0_2, %c0_3] : memref<8x128xf32, #tpu.memory_space<vmem>>, vector<8x128xf32>
    %c0_4 = arith.constant 0 : index
    %c0_5 = arith.constant 0 : index
    %5 = vector.load %arg4[%c0_4, %c0_5] : memref<128x128xf32, #tpu.memory_space<vmem>>, vector<128x128xf32>
    %cst = arith.constant dense<0.000000e+00> : vector<8x128xf32>
    %6 = tpu.matmul %4, %5, %cst {dimension_numbers = #tpu.dot_dimension_numbers<[1], [0], [0], [1], [0, 0, 1, 1], [], []>} : vector<8x128xf32>, vector<128x128xf32>, vector<8x128xf32> -> vector<8x128xf32>
    %7 = arith.addf %3, %6 : vector<8x128xf32>
    %c0_6 = arith.constant 0 : index
    %c0_7 = arith.constant 0 : index
    %8 = vector.load %arg6[%c0_6, %c0_7] : memref<8x128xf32, #tpu.memory_space<vmem>>, vector<8x128xf32>
    tpu.vector_store %arg6[%c0_6, %c0_7], %7 {strides = array<i32>} : memref<8x128xf32, #tpu.memory_space<vmem>>, vector<8x128xf32>,
    %c0_i32_8 = arith.constant 0 : i32
    %9 = arith.cmpi eq, %arg1, %c0_i32_8 : i32
    %10 = arith.extui %9 : i1 to i32
    %c0_i32_9 = arith.constant 0 : i32
    %11 = arith.cmpi ne, %10, %c0_i32_9 : i32
    scf.if %11 {
      %c0_10 = arith.constant 0 : index
      %c0_11 = arith.constant 0 : index
      %12 = vector.load %arg2[%c0_10, %c0_11] : memref<8x128xf32, #tpu.memory_space<vmem>>, vector<8x128xf32>
      %c0_12 = arith.constant 0 : index
      %c0_13 = arith.constant 0 : index
      %13 = vector.load %arg6[%c0_12, %c0_13] : memref<8x128xf32, #tpu.memory_space<vmem>>, vector<8x128xf32>
      %14 = arith.mulf %12, %13 : vector<8x128xf32>
      %cst_14 = arith.constant dense<0.000000e+00> : vector<8xf32>
      %15 = vector.multi_reduction <add>, %14, %cst_14 [1] : vector<8x128xf32> to vector<8xf32>
      %16 = vector.shape_cast %15 : vector<8xf32> to vector<8x1xf32>
      %c0_15 = arith.constant 0 : index
      %c0_16 = arith.constant 0 : index
      %17 = vector.load %arg5[%c0_15, %c0_16] : memref<8x1xf32, #tpu.memory_space<vmem>>, vector<8x1xf32>
      tpu.vector_store %arg5[%c0_15, %c0_16], %16 {strides = array<i32>} : memref<8x1xf32, #tpu.memory_space<vmem>>, vector<8x1xf32>,
    } else {
    }
    return
  }
  func.func @transform_0(%arg0: i32, %arg1: i32) -> (i32, i32) {
    %c0_i32 = arith.constant 0 : i32
    %c0_i32_0 = arith.constant 0 : i32
    return %arg0, %c0_i32 : i32, i32
  }
  func.func @transform_1(%arg0: i32, %arg1: i32) -> (i32, i32) {
    %c0_i32 = arith.constant 0 : i32
    return %arg0, %arg1 : i32, i32
  }
  func.func @transform_2(%arg0: i32, %arg1: i32) -> (i32, i32) {
    %c0_i32 = arith.constant 0 : i32
    %c0_i32_0 = arith.constant 0 : i32
    return %arg1, %c0_i32 : i32, i32
  }
  func.func @transform_3(%arg0: i32, %arg1: i32) -> (i32, i32) {
    %c0_i32 = arith.constant 0 : i32
    %c0_i32_0 = arith.constant 0 : i32
    return %arg0, %c0_i32 : i32, i32
  }
}

</mosaic_0001>

<llo_original>
// kernel: tpu_custom_call.1
$region0: #{tpu_custom_call.1}
  #allocation0 [shape = 'u32[]', space=smem, size = 0x4, offset = 0x4, fixed_abs, tag = 'smem constant byte address 0x4 - core index']
  #allocation1 [shape = 'u32[144,128]{1,0:T(1,128)}', space=vmem, size = 0x12000, scoped, tag = 'internal scratch']
  #allocation2 [shape = 'f32[8,128]{1,0:T(8,128)}', space=vmem, size = 0x1000, scoped, tag = 'scratch operand']
  %s0 = inlined_call_operand.hbm [shape: f32[8,128], index: 0, kind: input, shape index: {}]
  %s1 = inlined_call_operand.hbm [shape: f32[8,128], index: 1, kind: input, shape index: {}]
  %s2 = inlined_call_operand.hbm [shape: f32[128,128], index: 2, kind: input, shape index: {}]
  %s3 = inlined_call_operand.vmem [shape: f32[8,1], index: 3, kind: output, shape index: {}]
  %s4 = sld [smem:[#allocation0]]
  $region42: #{tpu_custom_call.1} parent=0
    _
  %s6 = ssub.s32 1, %s4
  %s7 = scalar_select 0, %s6, %s4
  $region1: #{tpu_custom_call.1} parent=0
    #allocation3 [shape = 'u8[4096]{0}', space=vmem, size = 0x1000, scoped, tag = 'input window, operand 0, single buffered']
    #allocation4 [shape = 's32[1]{0}', space=sflag, size = 0x4, scoped, tag = 'scoped memory for tpu_custom_call.1']
    #allocation5 [shape = 'u8[4096]{0}', space=vmem, size = 0x1000, scoped, tag = 'input window, operand 1, single buffered']
    #allocation6 [shape = 's32[1]{0}', space=sflag, size = 0x4, scoped, tag = 'scoped memory for tpu_custom_call.1']
    #allocation7 [shape = 'u8[65536]{0}', space=vmem, size = 0x10000, scoped, tag = 'input window, operand 2, single buffered']
    %8 = vsyncpa [#allocation4], 0
    %9 = vsyncpa [#allocation6], 0
    // Predicated region
    $region2: #{tpu_custom_call.1} parent=1 // pred_check
      _
    $region3: #{tpu_custom_call.1} parent=1 // pred_check_branch
      %11 = sbr.rel (0) target = $region5
    $region4: #{tpu_custom_call.1} parent=1 // pred_region
      %s13 = ssub.s32 128, 128
      %14 = vsyncadd [#allocation4], %s13
      %s16 = sshll.u32 [#allocation3], 4
      %s17 = int_to_ptr.vmem [resolvable:$true] %s16
      %19 = dma.hbm_to_vmem [thread:$0]  %s0, 128, %s17, [#allocation4]
    $region5: #{tpu_custom_call.1} parent=1 // pred_fallthru
      _
    // Predicated region
    $region6: #{tpu_custom_call.1} parent=1 // pred_check
      _
    $region7: #{tpu_custom_call.1} parent=1 // pred_check_branch
      %21 = sbr.rel (0) target = $region9
    $region8: #{tpu_custom_call.1} parent=1 // pred_region
      %s23 = ssub.s32 128, 128
      %24 = vsyncadd [#allocation6], %s23
      %s26 = sshll.u32 [#allocation5], 4
      %s27 = int_to_ptr.vmem [resolvable:$true] %s26
      %29 = dma.hbm_to_vmem [thread:$0]  %s1, 128, %s27, [#allocation6]
    $region9: #{tpu_custom_call.1} parent=1 // pred_fallthru
      _
    // Predicated region
    $region10: #{tpu_custom_call.1} parent=1 // pred_check
      _
    $region11: #{tpu_custom_call.1} parent=1 // pred_check_branch
      %31 = sbr.rel (0) target = $region13
    $region12: #{tpu_custom_call.1} parent=1 // pred_region
      %s33 = ssub.s32 2048, 2048
      %34 = vsyncadd [#allocation6], %s33
      %s35 = sshll.u32 [#allocation7], 4
      %s36 = int_to_ptr.vmem [resolvable:$true] %s35
      %41 = dma.hbm_to_vmem [thread:$0]  %s2, 2048, %s36, [#allocation6], 128, 128, 8
    $region13: #{tpu_custom_call.1} parent=1 // pred_fallthru
      _
    // Predicated region
    $region14: #{tpu_custom_call.1} parent=1 // pred_check
      _
    $region15: #{tpu_custom_call.1} parent=1 // pred_check_branch
      %43 = sbr.rel (0) target = $region17
    $region16: #{tpu_custom_call.1} parent=1 // pred_region
      %44 = dma.done [#allocation4], 128
    $region17: #{tpu_custom_call.1} parent=1 // pred_fallthru
      _
    // Predicated region
    $region18: #{tpu_custom_call.1} parent=1 // pred_check
      _
    $region19: #{tpu_custom_call.1} parent=1 // pred_check_branch
      %46 = sbr.rel (0) target = $region21
    $region20: #{tpu_custom_call.1} parent=1 // pred_region
      %47 = dma.done [#allocation6], 128
    $region21: #{tpu_custom_call.1} parent=1 // pred_fallthru
      _
    // Predicated region
    $region22: #{tpu_custom_call.1} parent=1 // pred_check
      _
    $region23: #{tpu_custom_call.1} parent=1 // pred_check_branch
      %49 = sbr.rel (0) target = $region25
    $region24: #{tpu_custom_call.1} parent=1 // pred_region
      %50 = dma.done [#allocation6], 2048
    $region25: #{tpu_custom_call.1} parent=1 // pred_fallthru
      _
    %p51 = scmp.eq.s32.totalorder 0, 0
    // Predicated region
    $region26: #{tpu_custom_call.1} parent=1 // pred_check
      %p52 = pneg %p51
    $region27: #{tpu_custom_call.1} parent=1 // pred_check_branch
      %54 = sbr.rel (%p52) target = $region29
    $region28: #{tpu_custom_call.1} parent=1 // pred_region
      %55 = vst [vmem:[#allocation2] sm:$0xff] 0.0
    $region29: #{tpu_custom_call.1} parent=1 // pred_fallthru
      _
    %v56 = vld [vmem:[#allocation2] sm:$0xff]
    %v57 = vld [vmem:[#allocation5] sm:$0xff]
    %v58 = vld [vmem:[#allocation7] sm:$0xff]
    %v59 = vld [vmem:[#allocation7 + $0x8] sm:$0xff]
    %v60 = vld [vmem:[#allocation7 + $0x10] sm:$0xff]
    %v61 = vld [vmem:[#allocation7 + $0x18] sm:$0xff]
    %v62 = vld [vmem:[#allocation7 + $0x20] sm:$0xff]
    %v63 = vld [vmem:[#allocation7 + $0x28] sm:$0xff]
    %v64 = vld [vmem:[#allocation7 + $0x30] sm:$0xff]
    %v65 = vld [vmem:[#allocation7 + $0x38] sm:$0xff]
    %v66 = vld [vmem:[#allocation7 + $0x40] sm:$0xff]
    %v67 = vld [vmem:[#allocation7 + $0x48] sm:$0xff]
    %v68 = vld [vmem:[#allocation7 + $0x50] sm:$0xff]
    %v69 = vld [vmem:[#allocation7 + $0x58] sm:$0xff]
    %v70 = vld [vmem:[#allocation7 + $0x60] sm:$0xff]
    %v71 = vld [vmem:[#allocation7 + $0x68] sm:$0xff]
    %v72 = vld [vmem:[#allocation7 + $0x70] sm:$0xff]
    %v73 = vld [vmem:[#allocation7 + $0x78] sm:$0xff]
    %74 = vmatprep.subr.mxu0 0.0
    %75 = vmatpush1.msra.mxu0 %v58
    %76 = vmatprep.subr.mxu0 0.0
    %77 = vmatpush1.msra.mxu0 %v59
    %78 = vmatprep.subr.mxu0 0.0
    %79 = vmatpush1.msra.mxu0 %v60
    %80 = vmatprep.subr.mxu0 0.0
    %81 = vmatpush1.msra.mxu0 %v61
    %82 = vmatprep.subr.mxu0 0.0
    %83 = vmatpush1.msra.mxu0 %v62
    %84 = vmatprep.subr.mxu0 0.0
    %85 = vmatpush1.msra.mxu0 %v63
    %86 = vmatprep.subr.mxu0 0.0
    %87 = vmatpush1.msra.mxu0 %v64
    %88 = vmatprep.subr.mxu0 0.0
    %89 = vmatpush1.msra.mxu0 %v65
    %90 = vmatprep.subr.mxu0 0.0
    %91 = vmatpush1.msra.mxu0 %v66
    %92 = vmatprep.subr.mxu0 0.0
    %93 = vmatpush1.msra.mxu0 %v67
    %94 = vmatprep.subr.mxu0 0.0
    %95 = vmatpush1.msra.mxu0 %v68
    %96 = vmatprep.subr.mxu0 0.0
    %97 = vmatpush1.msra.mxu0 %v69
    %98 = vmatprep.subr.mxu0 0.0
    %99 = vmatpush1.msra.mxu0 %v70
    %100 = vmatprep.subr.mxu0 0.0
    %101 = vmatpush1.msra.mxu0 %v71
    %102 = vmatprep.subr.mxu0 0.0
    %103 = vmatpush1.msra.mxu0 %v72
    %104 = vmatprep.subr.mxu0 0.0
    %105 = vmatpush1.msra.mxu0 %v73
    %106 = vmatprep.subr.mxu0 0.0
    %107 = vmatpush1.msra.mxu0 0.0
    %108 = vmatprep.subr.mxu0 0.0
    %109 = vmatpush1.msra.mxu0 0.0
    %110 = vmatprep.subr.mxu0 0.0
    %111 = vmatpush1.msra.mxu0 0.0
    %112 = vmatprep.subr.mxu0 0.0
    %113 = vmatpush1.msra.mxu0 0.0
    %114 = vmatprep.subr.mxu0 0.0
    %115 = vmatpush1.msra.mxu0 0.0
    %116 = vmatprep.subr.mxu0 0.0
    %117 = vmatpush1.msra.mxu0 0.0
    %118 = vmatprep.subr.mxu0 0.0
    %119 = vmatpush1.msra.mxu0 0.0
    %120 = vmatprep.subr.mxu0 0.0
    %121 = vmatpush1.msra.mxu0 0.0
    %122 = vmatprep.subr.mxu0 0.0
    %123 = vmatpush1.msra.mxu0 0.0
    %124 = vmatprep.subr.mxu0 0.0
    %125 = vmatpush1.msra.mxu0 0.0
    %126 = vmatprep.subr.mxu0 0.0
    %127 = vmatpush1.msra.mxu0 0.0
    %128 = vmatprep.subr.mxu0 0.0
    %129 = vmatpush1.msra.mxu0 0.0
    %130 = vmatprep.subr.mxu0 0.0
    %131 = vmatpush1.msra.mxu0 0.0
    %132 = vmatprep.subr.mxu0 0.0
    %133 = vmatpush1.msra.mxu0 0.0
    %134 = vmatprep.subr.mxu0 0.0
    %135 = vmatpush1.msra.mxu0 0.0
    %136 = vmatprep.subr.mxu0 0.0
    %137 = vmatpush1.msra.mxu0 0.0
    %138 = vmatprep.mubr.f32.mxu0 0.0
    %139 = vmatmul.mubr.f32.gmra.mrb[0].mxu0 %v57
    %v140 = vpop.f32.mrb[0].mxu0
    %v141 = vadd.f32 0.0, %v140
    %v142 = vpop.f32.mrb[0].mxu0
    %143 = vdwg.mxu0
    %v144 = vadd.f32 %v56, %v141
    %145 = vst [vmem:[#allocation2] sm:$0xff] %v144
    // Predicated region
    $region30: #{tpu_custom_call.1} parent=1 // pred_check
      %p146 = pneg %p51
    $region31: #{tpu_custom_call.1} parent=1 // pred_check_branch
      %148 = sbr.rel (%p146) target = $region33
    $region32: #{tpu_custom_call.1} parent=1 // pred_region
      %v149 = vld [vmem:[#allocation3] sm:$0xff]
      %v150 = vld [vmem:[#allocation2] sm:$0xff]
      %v151 = vmul.f32 %v149, %v150
      %152 = vadd.xlane.f32.xlu0 %v151
      %v153 = vpop.xlane.xlu0 %152
      %vm154 = vcmask 7168
      %155 = vst.msk [vmem:[%s3] sm:$0xff] %vm154, %v153
    $region33: #{tpu_custom_call.1} parent=1 // pred_fallthru
      _
    // Predicated region
    $region34: #{tpu_custom_call.1} parent=1 // pred_check
      _
    $region35: #{tpu_custom_call.1} parent=1 // pred_check_branch
      %157 = sbr.rel (0) target = $region37
    $region36: #{tpu_custom_call.1} parent=1 // pred_region
      _
    $region37: #{tpu_custom_call.1} parent=1 // pred_fallthru
      _
    // Predicated region
    $region38: #{tpu_custom_call.1} parent=1 // pred_check
      _
    $region39: #{tpu_custom_call.1} parent=1 // pred_check_branch
      %159 = sbr.rel (0) target = $region41
    $region40: #{tpu_custom_call.1} parent=1 // pred_region
      _
    $region41: #{tpu_custom_call.1} parent=1 // pred_fallthru
      _
    %160 = vsyncpa [#allocation4], 1
    %161 = vsyncpa [#allocation6], 1

</llo_original>
